<compile_context>
chip_gen: v7x
topology: tpu7x:2x2x1
jax: 0.10.0
libtpu: 0.0.40
codegen_flags: <defaults>
</compile_context>

<pallas_src>
import numpy as np
import jax
import jax.numpy as jnp
from jax import lax
from jax.experimental import pallas as pl
from jax.experimental.pallas import tpu as pltpu


def _round_up(x, m):
    return ((x + m - 1) // m) * m


def _pad_to(a, shape):
    pads = [(0, s - d) for d, s in zip(a.shape, shape)]
    return jnp.pad(a, pads)


def _pick_t_blk(S, Bp, Ip, Hp, Op, block_budget_bytes=8 << 20, cap=256):
    """Largest divisor of S whose pipelined blocks (x, act, out; double-buffered)
    fit inside `block_budget_bytes`."""
    per_t = 2 * Bp * (Ip + Hp + Op) * 4
    cap = max(1, min(cap, block_budget_bytes // max(per_t, 1), S))
    for t in range(int(cap), 0, -1):
        if S % t == 0:
            return t
    return 1


def _make_fused_kernel(alpha, t_blk):
    alpha = float(alpha)
    identity_leak = (alpha == 1.0)   # dt=None case: h_new = relu(pre)

    def kernel(x_ref, w_in_ref, b_ref, w_h_ref, w_fc_ref, b_fc_ref,
               act_ref, out_ref, h_ref):
        @pl.when(pl.program_id(0) == 0)
        def _():
            h_ref[...] = jnp.zeros_like(h_ref)

        _, Bp, Ip = x_ref.shape
        Hp = h_ref.shape[-1]
        Op = out_ref.shape[-1]

        # Input projection for the whole time block with fused bias (b_in + b_h):
        # a single MXU op off the serial critical path. Stage the result in
        # act_ref (VMEM) so it does not occupy vregs across the serial loop.
        x2 = x_ref[...].reshape(t_blk * Bp, Ip)
        ext = jnp.dot(x2, w_in_ref[...], preferred_element_type=jnp.float32) + b_ref[...]
        act_ref[...] = ext.reshape(t_blk, Bp, Hp)

        w_h = w_h_ref[...]

        def step(i, h):
            # Per-timestep serial chain: h@W_h -> add ext -> (leak) -> relu.
            pre = act_ref[i] + jnp.dot(h, w_h, preferred_element_type=jnp.float32)
            if identity_leak:
                h = jnp.maximum(pre, 0.0)
            else:
                h = jnp.maximum(h + alpha * (pre - h), 0.0)
            act_ref[i] = h
            return h

        h = h_ref[...]
        if t_blk <= 8:
            for i in range(t_blk):          # short static unroll
                h = step(i, h)
        else:
            h = lax.fori_loop(0, t_blk, step, h)
        h_ref[...] = h

        # Fused readout for the whole block: one big lane-dense MXU op, off the
        # serial chain (overlaps with the next block's input DMA).
        a2 = act_ref[...].reshape(t_blk * Bp, Hp)
        o2 = jnp.dot(a2, w_fc_ref[...], preferred_element_type=jnp.float32) + b_fc_ref[...]
        out_ref[...] = o2.reshape(t_blk, Bp, Op)

    return kernel


def _const_spec(shape, buffers=None):
    """BlockSpec for a loop-invariant operand (constant index map)."""
    idx = lambda tb: (0,) * len(shape)
    if buffers is None:
        return pl.BlockSpec(shape, idx)
    # Constant-index blocks gain nothing from double buffering; buffers=1 halves
    # their VMEM residency (recommended for v7x's 64 MiB VMEM).
    return pl.BlockSpec(shape, idx, pipeline_mode=pl.Buffered(buffers))


def rnn_md_forward(x, params, sub_id=None, alpha=1.0, t_blk=None, weight_buffers=None):
    """x: (seq, batch, input_size) float32. Returns (out, rnn_activity)."""
    del sub_id  # unused by the reference module's recurrence
    S, B, I = x.shape
    H = params["w_h"].shape[0]
    O = params["w_fc"].shape[0]

    f32 = jnp.float32
    # Lane/sublane-dense padding: lane dims (H, O) to 128, batch to 8. The input
    # feature dim is only the contraction dim of an off-chain matmul -> pad to 8.
    Bp = _round_up(B, 8)
    Ip = _round_up(I, 8)
    Hp = _round_up(H, 128)
    Op = _round_up(O, 128)

    x_p = _pad_to(x.astype(f32), (S, Bp, Ip))
    w_in_t = _pad_to(params["w_in"].T.astype(f32), (Ip, Hp))    # (I,H) -> (Ip,Hp)
    w_h_t = _pad_to(params["w_h"].T.astype(f32), (Hp, Hp))
    w_fc_t = _pad_to(params["w_fc"].T.astype(f32), (Hp, Op))
    # b_h folded into the per-block bias -> removed from the per-timestep chain.
    b_fused = _pad_to((params["b_in"] + params["b_h"]).reshape(1, H).astype(f32), (1, Hp))
    b_fc = _pad_to(params["b_fc"].reshape(1, O).astype(f32), (1, Op))

    if t_blk is None:
        t_blk = _pick_t_blk(S, Bp, Ip, Hp, Op)
    assert S % t_blk == 0
    n_blk = S // t_blk

    # Explicit VMEM limit derived from estimated residency (never below the
    # conservative 32 MiB default so the estimate can't under-provision).
    block_bytes = 2 * t_blk * Bp * (Ip + Hp + Op) * 4            # x, act, out (x2 buf)
    wmul = 2 if weight_buffers is None else weight_buffers
    weight_bytes = wmul * (Ip * Hp + Hp * Hp + Hp * Op + Hp + Op) * 4
    scratch_bytes = Bp * Hp * 4
    vmem_limit = int(min(max(2 * (block_bytes + weight_bytes + scratch_bytes), 32 << 20),
                         128 << 20))

    kernel = _make_fused_kernel(alpha, t_blk)
    act_p, out_p = pl.pallas_call(
        kernel,
        out_shape=(jax.ShapeDtypeStruct((S, Bp, Hp), f32),
                   jax.ShapeDtypeStruct((S, Bp, Op), f32)),
        grid_spec=pltpu.PrefetchScalarGridSpec(
            num_scalar_prefetch=0,
            grid=(n_blk,),
            in_specs=[
                pl.BlockSpec((t_blk, Bp, Ip), lambda tb: (tb, 0, 0)),   # x block
                _const_spec((Ip, Hp), weight_buffers),                  # W_in^T
                _const_spec((1, Hp), weight_buffers),                   # b_in + b_h
                _const_spec((Hp, Hp), weight_buffers),                  # W_h^T
                _const_spec((Hp, Op), weight_buffers),                  # W_fc^T
                _const_spec((1, Op), weight_buffers),                   # b_fc
            ],
            out_specs=[
                pl.BlockSpec((t_blk, Bp, Hp), lambda tb: (tb, 0, 0)),   # rnn activity
                pl.BlockSpec((t_blk, Bp, Op), lambda tb: (tb, 0, 0)),   # readout
            ],
            scratch_shapes=[pltpu.VMEM((Bp, Hp), f32)],                 # carried h
        ),
        compiler_params=pltpu.CompilerParams(
            dimension_semantics=("arbitrary",),   # time recurrence is sequential
            vmem_limit_bytes=vmem_limit,
        ),
    )(x_p, w_in_t, b_fused, w_h_t, w_fc_t, b_fc)

    out = out_p[:, :B, :O]
    act = act_p[:, :B, :H]
    return out, act


def init_params(key, input_size, hidden_size, output_size):
    """Deterministic init mimicking nn.Linear defaults + CTRNN_MD.reset_parameters."""
    ks = jax.random.split(key, 6)

    def linear_init(kw, kb, fan_in, shape_w, shape_b):
        bound = 1.0 / np.sqrt(fan_in)
        w = jax.random.uniform(kw, shape_w, jnp.float32, -bound, bound)
        b = jax.random.uniform(kb, shape_b, jnp.float32, -bound, bound)
        return w, b

    w_in, b_in = linear_init(ks[0], ks[1], input_size,
                             (hidden_size, input_size), (hidden_size,))
    # h2h: weight reset to 0.5 * eye; bias keeps default uniform init.
    _, b_h = linear_init(ks[2], ks[3], hidden_size,
                         (hidden_size, hidden_size), (hidden_size,))
    w_h = 0.5 * jnp.eye(hidden_size, dtype=jnp.float32)
    w_fc, b_fc = linear_init(ks[4], ks[5], hidden_size,
                             (output_size, hidden_size), (output_size,))
    return dict(w_in=w_in, b_in=b_in, w_h=w_h, b_h=b_h, w_fc=w_fc, b_fc=b_fc)


def reference_forward(x, params, alpha=1.0):
    """Pure-JAX reference matching the PyTorch module (eval-mode dropout)."""
    S, B, I = x.shape
    H = params["w_h"].shape[0]
    h = jnp.zeros((B, H), jnp.float32)
    outs = []
    for t in range(S):
        ext = x[t] @ params["w_in"].T + params["b_in"]
        rec = h @ params["w_h"].T + params["b_h"]
        pre = ext + rec
        h = jnp.maximum(h * (1.0 - alpha) + pre * alpha, 0.0)
        outs.append(h)
    act = jnp.stack(outs, axis=0)
    out = act @ params["w_fc"].T + params["b_fc"]
    return out, act


if __name__ == "__main__":
    seq_len, batch, input_size = 8, 2, 4
    hidden_size, sub_size, output_size, num_task = 32, 8, 8, 2

    key = jax.random.PRNGKey(0)
    k_x, k_p = jax.random.split(key)
    x = jax.random.normal(k_x, (seq_len, batch, input_size), jnp.float32)
    params = init_params(k_p, input_size, hidden_size, output_size)

    # dt=None in the module -> alpha = 1.0
    fwd = jax.jit(lambda xx, pp: rnn_md_forward(xx, pp, alpha=1.0))
    out, act = jax.block_until_ready(fwd(x, params))

    ref_out, ref_act = reference_forward(x, params, alpha=1.0)
    np.testing.assert_allclose(np.asarray(out), np.asarray(ref_out), rtol=1e-5, atol=1e-5)
    np.testing.assert_allclose(np.asarray(act), np.asarray(ref_act), rtol=1e-5, atol=1e-5)

    print("KERNEL_OK")
</pallas_src>

<mosaic_0001>
module attributes {stable_mosaic.version = 11 : i64} {
  func.func @kernel(%arg0: i32, %arg1: memref<8x8x8xf32, #tpu.memory_space<vmem>>, %arg2: memref<8x128xf32, #tpu.memory_space<vmem>>, %arg3: memref<1x128xf32, #tpu.memory_space<vmem>>, %arg4: memref<128x128xf32, #tpu.memory_space<vmem>>, %arg5: memref<128x128xf32, #tpu.memory_space<vmem>>, %arg6: memref<1x128xf32, #tpu.memory_space<vmem>>, %arg7: memref<8x8x128xf32, #tpu.memory_space<vmem>>, %arg8: memref<8x8x128xf32, #tpu.memory_space<vmem>>, %arg9: memref<8x128xf32, #tpu.memory_space<vmem>>) attributes {dimension_semantics = [#tpu.dimension_semantics<arbitrary>], iteration_bounds = array<i64: 1>, scalar_prefetch = 0 : i64, scratch_operands = 1 : i64, tpu.core_type = #tpu.core_type<tc>, window_params = [{transform_indices = @transform_0, window_bounds = array<i64: 8, 8, 8>}, {pipeline_mode = #tpu.pipeline_mode<synchronous>, transform_indices = @transform_1, window_bounds = array<i64: 8, 128>}, {pipeline_mode = #tpu.pipeline_mode<synchronous>, transform_indices = @transform_2, window_bounds = array<i64: 1, 128>}, {pipeline_mode = #tpu.pipeline_mode<synchronous>, transform_indices = @transform_3, window_bounds = array<i64: 128, 128>}, {pipeline_mode = #tpu.pipeline_mode<synchronous>, transform_indices = @transform_4, window_bounds = array<i64: 128, 128>}, {pipeline_mode = #tpu.pipeline_mode<synchronous>, transform_indices = @transform_5, window_bounds = array<i64: 1, 128>}, {transform_indices = @transform_6, window_bounds = array<i64: 8, 8, 128>}, {transform_indices = @transform_7, window_bounds = array<i64: 8, 8, 128>}]} {
    %c0_i32 = arith.constant 0 : i32
    %0 = arith.cmpi eq, %arg0, %c0_i32 : i32
    %1 = arith.extui %0 : i1 to i32
    %c0_i32_0 = arith.constant 0 : i32
    %2 = arith.cmpi ne, %1, %c0_i32_0 : i32
    scf.if %2 {
      %cst_84 = arith.constant 0.000000e+00 : f32
      %96 = vector.broadcast %cst_84 : f32 to vector<8x128xf32>
      %c0_85 = arith.constant 0 : index
      %c0_86 = arith.constant 0 : index
      %97 = vector.load %arg9[%c0_85, %c0_86] : memref<8x128xf32, #tpu.memory_space<vmem>>, vector<8x128xf32>
      tpu.vector_store %arg9[%c0_85, %c0_86], %96 {strides = array<i32>} : memref<8x128xf32, #tpu.memory_space<vmem>>, vector<8x128xf32>,
    } else {
    }
    %c0 = arith.constant 0 : index
    %c0_1 = arith.constant 0 : index
    %c0_2 = arith.constant 0 : index
    %3 = vector.load %arg1[%c0, %c0_1, %c0_2] : memref<8x8x8xf32, #tpu.memory_space<vmem>>, vector<8x8x8xf32>
    %4 = vector.shape_cast %3 : vector<8x8x8xf32> to vector<64x8xf32>
    %c0_3 = arith.constant 0 : index
    %c0_4 = arith.constant 0 : index
    %5 = vector.load %arg2[%c0_3, %c0_4] : memref<8x128xf32, #tpu.memory_space<vmem>>, vector<8x128xf32>
    %cst = arith.constant dense<0.000000e+00> : vector<64x128xf32>
    %6 = tpu.matmul %4, %5, %cst {dimension_numbers = #tpu.dot_dimension_numbers<[1], [0], [0], [1], [0, 0, 1, 1], [], []>} : vector<64x8xf32>, vector<8x128xf32>, vector<64x128xf32> -> vector<64x128xf32>
    %c0_5 = arith.constant 0 : index
    %c0_6 = arith.constant 0 : index
    %7 = vector.load %arg3[%c0_5, %c0_6] : memref<1x128xf32, #tpu.memory_space<vmem>>, vector<1x128xf32>
    %8 = vector.broadcast %7 : vector<1x128xf32> to vector<64x128xf32>
    %9 = arith.addf %6, %8 : vector<64x128xf32>
    %10 = vector.shape_cast %9 : vector<64x128xf32> to vector<8x8x128xf32>
    %c0_7 = arith.constant 0 : index
    %c0_8 = arith.constant 0 : index
    %c0_9 = arith.constant 0 : index
    %11 = vector.load %arg7[%c0_7, %c0_8, %c0_9] : memref<8x8x128xf32, #tpu.memory_space<vmem>>, vector<8x8x128xf32>
    tpu.vector_store %arg7[%c0_7, %c0_8, %c0_9], %10 {strides = array<i32>} : memref<8x8x128xf32, #tpu.memory_space<vmem>>, vector<8x8x128xf32>,
    %c0_10 = arith.constant 0 : index
    %c0_11 = arith.constant 0 : index
    %12 = vector.load %arg4[%c0_10, %c0_11] : memref<128x128xf32, #tpu.memory_space<vmem>>, vector<128x128xf32>
    %c0_12 = arith.constant 0 : index
    %c0_13 = arith.constant 0 : index
    %13 = vector.load %arg9[%c0_12, %c0_13] : memref<8x128xf32, #tpu.memory_space<vmem>>, vector<8x128xf32>
    %c0_14 = arith.constant 0 : index
    %c0_15 = arith.constant 0 : index
    %c0_16 = arith.constant 0 : index
    %14 = vector.load %arg7[%c0_14, %c0_15, %c0_16] : memref<8x8x128xf32, #tpu.memory_space<vmem>>, vector<1x8x128xf32>
    %15 = vector.shape_cast %14 : vector<1x8x128xf32> to vector<8x128xf32>
    %cst_17 = arith.constant dense<0.000000e+00> : vector<8x128xf32>
    %16 = tpu.matmul %13, %12, %cst_17 {dimension_numbers = #tpu.dot_dimension_numbers<[1], [0], [0], [1], [0, 0, 1, 1], [], []>} : vector<8x128xf32>, vector<128x128xf32>, vector<8x128xf32> -> vector<8x128xf32>
    %17 = arith.addf %15, %16 : vector<8x128xf32>
    %cst_18 = arith.constant 0.000000e+00 : f32
    %18 = vector.broadcast %cst_18 : f32 to vector<8x128xf32>
    %19 = arith.maximumf %17, %18 : vector<8x128xf32>
    %c0_19 = arith.constant 0 : index
    %c0_20 = arith.constant 0 : index
    %c0_21 = arith.constant 0 : index
    %20 = vector.load %arg7[%c0_19, %c0_20, %c0_21] : memref<8x8x128xf32, #tpu.memory_space<vmem>>, vector<1x8x128xf32>
    %21 = vector.shape_cast %20 : vector<1x8x128xf32> to vector<8x128xf32>
    %22 = vector.shape_cast %19 : vector<8x128xf32> to vector<1x8x128xf32>
    tpu.vector_store %arg7[%c0_19, %c0_20, %c0_21], %22 {strides = array<i32>} : memref<8x8x128xf32, #tpu.memory_space<vmem>>, vector<1x8x128xf32>,
    %c1 = arith.constant 1 : index
    %c0_22 = arith.constant 0 : index
    %c0_23 = arith.constant 0 : index
    %23 = vector.load %arg7[%c1, %c0_22, %c0_23] : memref<8x8x128xf32, #tpu.memory_space<vmem>>, vector<1x8x128xf32>
    %24 = vector.shape_cast %23 : vector<1x8x128xf32> to vector<8x128xf32>
    %cst_24 = arith.constant dense<0.000000e+00> : vector<8x128xf32>
    %25 = tpu.matmul %19, %12, %cst_24 {dimension_numbers = #tpu.dot_dimension_numbers<[1], [0], [0], [1], [0, 0, 1, 1], [], []>} : vector<8x128xf32>, vector<128x128xf32>, vector<8x128xf32> -> vector<8x128xf32>
    %26 = arith.addf %24, %25 : vector<8x128xf32>
    %cst_25 = arith.constant 0.000000e+00 : f32
    %27 = vector.broadcast %cst_25 : f32 to vector<8x128xf32>
    %28 = arith.maximumf %26, %27 : vector<8x128xf32>
    %c1_26 = arith.constant 1 : index
    %c0_27 = arith.constant 0 : index
    %c0_28 = arith.constant 0 : index
    %29 = vector.load %arg7[%c1_26, %c0_27, %c0_28] : memref<8x8x128xf32, #tpu.memory_space<vmem>>, vector<1x8x128xf32>
    %30 = vector.shape_cast %29 : vector<1x8x128xf32> to vector<8x128xf32>
    %31 = vector.shape_cast %28 : vector<8x128xf32> to vector<1x8x128xf32>
    tpu.vector_store %arg7[%c1_26, %c0_27, %c0_28], %31 {strides = array<i32>} : memref<8x8x128xf32, #tpu.memory_space<vmem>>, vector<1x8x128xf32>,
    %c2 = arith.constant 2 : index
    %c0_29 = arith.constant 0 : index
    %c0_30 = arith.constant 0 : index
    %32 = vector.load %arg7[%c2, %c0_29, %c0_30] : memref<8x8x128xf32, #tpu.memory_space<vmem>>, vector<1x8x128xf32>
    %33 = vector.shape_cast %32 : vector<1x8x128xf32> to vector<8x128xf32>
    %cst_31 = arith.constant dense<0.000000e+00> : vector<8x128xf32>
    %34 = tpu.matmul %28, %12, %cst_31 {dimension_numbers = #tpu.dot_dimension_numbers<[1], [0], [0], [1], [0, 0, 1, 1], [], []>} : vector<8x128xf32>, vector<128x128xf32>, vector<8x128xf32> -> vector<8x128xf32>
    %35 = arith.addf %33, %34 : vector<8x128xf32>
    %cst_32 = arith.constant 0.000000e+00 : f32
    %36 = vector.broadcast %cst_32 : f32 to vector<8x128xf32>
    %37 = arith.maximumf %35, %36 : vector<8x128xf32>
    %c2_33 = arith.constant 2 : index
    %c0_34 = arith.constant 0 : index
    %c0_35 = arith.constant 0 : index
    %38 = vector.load %arg7[%c2_33, %c0_34, %c0_35] : memref<8x8x128xf32, #tpu.memory_space<vmem>>, vector<1x8x128xf32>
    %39 = vector.shape_cast %38 : vector<1x8x128xf32> to vector<8x128xf32>
    %40 = vector.shape_cast %37 : vector<8x128xf32> to vector<1x8x128xf32>
    tpu.vector_store %arg7[%c2_33, %c0_34, %c0_35], %40 {strides = array<i32>} : memref<8x8x128xf32, #tpu.memory_space<vmem>>, vector<1x8x128xf32>,
    %c3 = arith.constant 3 : index
    %c0_36 = arith.constant 0 : index
    %c0_37 = arith.constant 0 : index
    %41 = vector.load %arg7[%c3, %c0_36, %c0_37] : memref<8x8x128xf32, #tpu.memory_space<vmem>>, vector<1x8x128xf32>
    %42 = vector.shape_cast %41 : vector<1x8x128xf32> to vector<8x128xf32>
    %cst_38 = arith.constant dense<0.000000e+00> : vector<8x128xf32>
    %43 = tpu.matmul %37, %12, %cst_38 {dimension_numbers = #tpu.dot_dimension_numbers<[1], [0], [0], [1], [0, 0, 1, 1], [], []>} : vector<8x128xf32>, vector<128x128xf32>, vector<8x128xf32> -> vector<8x128xf32>
    %44 = arith.addf %42, %43 : vector<8x128xf32>
    %cst_39 = arith.constant 0.000000e+00 : f32
    %45 = vector.broadcast %cst_39 : f32 to vector<8x128xf32>
    %46 = arith.maximumf %44, %45 : vector<8x128xf32>
    %c3_40 = arith.constant 3 : index
    %c0_41 = arith.constant 0 : index
    %c0_42 = arith.constant 0 : index
    %47 = vector.load %arg7[%c3_40, %c0_41, %c0_42] : memref<8x8x128xf32, #tpu.memory_space<vmem>>, vector<1x8x128xf32>
    %48 = vector.shape_cast %47 : vector<1x8x128xf32> to vector<8x128xf32>
    %49 = vector.shape_cast %46 : vector<8x128xf32> to vector<1x8x128xf32>
    tpu.vector_store %arg7[%c3_40, %c0_41, %c0_42], %49 {strides = array<i32>} : memref<8x8x128xf32, #tpu.memory_space<vmem>>, vector<1x8x128xf32>,
    %c4 = arith.constant 4 : index
    %c0_43 = arith.constant 0 : index
    %c0_44 = arith.constant 0 : index
    %50 = vector.load %arg7[%c4, %c0_43, %c0_44] : memref<8x8x128xf32, #tpu.memory_space<vmem>>, vector<1x8x128xf32>
    %51 = vector.shape_cast %50 : vector<1x8x128xf32> to vector<8x128xf32>
    %cst_45 = arith.constant dense<0.000000e+00> : vector<8x128xf32>
    %52 = tpu.matmul %46, %12, %cst_45 {dimension_numbers = #tpu.dot_dimension_numbers<[1], [0], [0], [1], [0, 0, 1, 1], [], []>} : vector<8x128xf32>, vector<128x128xf32>, vector<8x128xf32> -> vector<8x128xf32>
    %53 = arith.addf %51, %52 : vector<8x128xf32>
    %cst_46 = arith.constant 0.000000e+00 : f32
    %54 = vector.broadcast %cst_46 : f32 to vector<8x128xf32>
    %55 = arith.maximumf %53, %54 : vector<8x128xf32>
    %c4_47 = arith.constant 4 : index
    %c0_48 = arith.constant 0 : index
    %c0_49 = arith.constant 0 : index
    %56 = vector.load %arg7[%c4_47, %c0_48, %c0_49] : memref<8x8x128xf32, #tpu.memory_space<vmem>>, vector<1x8x128xf32>
    %57 = vector.shape_cast %56 : vector<1x8x128xf32> to vector<8x128xf32>
    %58 = vector.shape_cast %55 : vector<8x128xf32> to vector<1x8x128xf32>
    tpu.vector_store %arg7[%c4_47, %c0_48, %c0_49], %58 {strides = array<i32>} : memref<8x8x128xf32, #tpu.memory_space<vmem>>, vector<1x8x128xf32>,
    %c5 = arith.constant 5 : index
    %c0_50 = arith.constant 0 : index
    %c0_51 = arith.constant 0 : index
    %59 = vector.load %arg7[%c5, %c0_50, %c0_51] : memref<8x8x128xf32, #tpu.memory_space<vmem>>, vector<1x8x128xf32>
    %60 = vector.shape_cast %59 : vector<1x8x128xf32> to vector<8x128xf32>
    %cst_52 = arith.constant dense<0.000000e+00> : vector<8x128xf32>
    %61 = tpu.matmul %55, %12, %cst_52 {dimension_numbers = #tpu.dot_dimension_numbers<[1], [0], [0], [1], [0, 0, 1, 1], [], []>} : vector<8x128xf32>, vector<128x128xf32>, vector<8x128xf32> -> vector<8x128xf32>
    %62 = arith.addf %60, %61 : vector<8x128xf32>
    %cst_53 = arith.constant 0.000000e+00 : f32
    %63 = vector.broadcast %cst_53 : f32 to vector<8x128xf32>
    %64 = arith.maximumf %62, %63 : vector<8x128xf32>
    %c5_54 = arith.constant 5 : index
    %c0_55 = arith.constant 0 : index
    %c0_56 = arith.constant 0 : index
    %65 = vector.load %arg7[%c5_54, %c0_55, %c0_56] : memref<8x8x128xf32, #tpu.memory_space<vmem>>, vector<1x8x128xf32>
    %66 = vector.shape_cast %65 : vector<1x8x128xf32> to vector<8x128xf32>
    %67 = vector.shape_cast %64 : vector<8x128xf32> to vector<1x8x128xf32>
    tpu.vector_store %arg7[%c5_54, %c0_55, %c0_56], %67 {strides = array<i32>} : memref<8x8x128xf32, #tpu.memory_space<vmem>>, vector<1x8x128xf32>,
    %c6 = arith.constant 6 : index
    %c0_57 = arith.constant 0 : index
    %c0_58 = arith.constant 0 : index
    %68 = vector.load %arg7[%c6, %c0_57, %c0_58] : memref<8x8x128xf32, #tpu.memory_space<vmem>>, vector<1x8x128xf32>
    %69 = vector.shape_cast %68 : vector<1x8x128xf32> to vector<8x128xf32>
    %cst_59 = arith.constant dense<0.000000e+00> : vector<8x128xf32>
    %70 = tpu.matmul %64, %12, %cst_59 {dimension_numbers = #tpu.dot_dimension_numbers<[1], [0], [0], [1], [0, 0, 1, 1], [], []>} : vector<8x128xf32>, vector<128x128xf32>, vector<8x128xf32> -> vector<8x128xf32>
    %71 = arith.addf %69, %70 : vector<8x128xf32>
    %cst_60 = arith.constant 0.000000e+00 : f32
    %72 = vector.broadcast %cst_60 : f32 to vector<8x128xf32>
    %73 = arith.maximumf %71, %72 : vector<8x128xf32>
    %c6_61 = arith.constant 6 : index
    %c0_62 = arith.constant 0 : index
    %c0_63 = arith.constant 0 : index
    %74 = vector.load %arg7[%c6_61, %c0_62, %c0_63] : memref<8x8x128xf32, #tpu.memory_space<vmem>>, vector<1x8x128xf32>
    %75 = vector.shape_cast %74 : vector<1x8x128xf32> to vector<8x128xf32>
    %76 = vector.shape_cast %73 : vector<8x128xf32> to vector<1x8x128xf32>
    tpu.vector_store %arg7[%c6_61, %c0_62, %c0_63], %76 {strides = array<i32>} : memref<8x8x128xf32, #tpu.memory_space<vmem>>, vector<1x8x128xf32>,
    %c7 = arith.constant 7 : index
    %c0_64 = arith.constant 0 : index
    %c0_65 = arith.constant 0 : index
    %77 = vector.load %arg7[%c7, %c0_64, %c0_65] : memref<8x8x128xf32, #tpu.memory_space<vmem>>, vector<1x8x128xf32>
    %78 = vector.shape_cast %77 : vector<1x8x128xf32> to vector<8x128xf32>
    %cst_66 = arith.constant dense<0.000000e+00> : vector<8x128xf32>
    %79 = tpu.matmul %73, %12, %cst_66 {dimension_numbers = #tpu.dot_dimension_numbers<[1], [0], [0], [1], [0, 0, 1, 1], [], []>} : vector<8x128xf32>, vector<128x128xf32>, vector<8x128xf32> -> vector<8x128xf32>
    %80 = arith.addf %78, %79 : vector<8x128xf32>
    %cst_67 = arith.constant 0.000000e+00 : f32
    %81 = vector.broadcast %cst_67 : f32 to vector<8x128xf32>
    %82 = arith.maximumf %80, %81 : vector<8x128xf32>
    %c7_68 = arith.constant 7 : index
    %c0_69 = arith.constant 0 : index
    %c0_70 = arith.constant 0 : index
    %83 = vector.load %arg7[%c7_68, %c0_69, %c0_70] : memref<8x8x128xf32, #tpu.memory_space<vmem>>, vector<1x8x128xf32>
    %84 = vector.shape_cast %83 : vector<1x8x128xf32> to vector<8x128xf32>
    %85 = vector.shape_cast %82 : vector<8x128xf32> to vector<1x8x128xf32>
    tpu.vector_store %arg7[%c7_68, %c0_69, %c0_70], %85 {strides = array<i32>} : memref<8x8x128xf32, #tpu.memory_space<vmem>>, vector<1x8x128xf32>,
    %c0_71 = arith.constant 0 : index
    %c0_72 = arith.constant 0 : index
    %86 = vector.load %arg9[%c0_71, %c0_72] : memref<8x128xf32, #tpu.memory_space<vmem>>, vector<8x128xf32>
    tpu.vector_store %arg9[%c0_71, %c0_72], %82 {strides = array<i32>} : memref<8x128xf32, #tpu.memory_space<vmem>>, vector<8x128xf32>,
    %c0_73 = arith.constant 0 : index
    %c0_74 = arith.constant 0 : index
    %c0_75 = arith.constant 0 : index
    %87 = vector.load %arg7[%c0_73, %c0_74, %c0_75] : memref<8x8x128xf32, #tpu.memory_space<vmem>>, vector<8x8x128xf32>
    %88 = vector.shape_cast %87 : vector<8x8x128xf32> to vector<64x128xf32>
    %c0_76 = arith.constant 0 : index
    %c0_77 = arith.constant 0 : index
    %89 = vector.load %arg5[%c0_76, %c0_77] : memref<128x128xf32, #tpu.memory_space<vmem>>, vector<128x128xf32>
    %cst_78 = arith.constant dense<0.000000e+00> : vector<64x128xf32>
    %90 = tpu.matmul %88, %89, %cst_78 {dimension_numbers = #tpu.dot_dimension_numbers<[1], [0], [0], [1], [0, 0, 1, 1], [], []>} : vector<64x128xf32>, vector<128x128xf32>, vector<64x128xf32> -> vector<64x128xf32>
    %c0_79 = arith.constant 0 : index
    %c0_80 = arith.constant 0 : index
    %91 = vector.load %arg6[%c0_79, %c0_80] : memref<1x128xf32, #tpu.memory_space<vmem>>, vector<1x128xf32>
    %92 = vector.broadcast %91 : vector<1x128xf32> to vector<64x128xf32>
    %93 = arith.addf %90, %92 : vector<64x128xf32>
    %94 = vector.shape_cast %93 : vector<64x128xf32> to vector<8x8x128xf32>
    %c0_81 = arith.constant 0 : index
    %c0_82 = arith.constant 0 : index
    %c0_83 = arith.constant 0 : index
    %95 = vector.load %arg8[%c0_81, %c0_82, %c0_83] : memref<8x8x128xf32, #tpu.memory_space<vmem>>, vector<8x8x128xf32>
    tpu.vector_store %arg8[%c0_81, %c0_82, %c0_83], %94 {strides = array<i32>} : memref<8x8x128xf32, #tpu.memory_space<vmem>>, vector<8x8x128xf32>,
    return
  }
  func.func @transform_0(%arg0: i32) -> (i32, i32, i32) {
    %c0_i32 = arith.constant 0 : i32
    %c0_i32_0 = arith.constant 0 : i32
    %c0_i32_1 = arith.constant 0 : i32
    return %arg0, %c0_i32, %c0_i32_0 : i32, i32, i32
  }
  func.func @transform_1(%arg0: i32) -> (i32, i32) {
    %c0_i32 = arith.constant 0 : i32
    %c0_i32_0 = arith.constant 0 : i32
    %c0_i32_1 = arith.constant 0 : i32
    return %c0_i32, %c0_i32_0 : i32, i32
  }
  func.func @transform_2(%arg0: i32) -> (i32, i32) {
    %c0_i32 = arith.constant 0 : i32
    %c0_i32_0 = arith.constant 0 : i32
    %c0_i32_1 = arith.constant 0 : i32
    return %c0_i32, %c0_i32_0 : i32, i32
  }
  func.func @transform_3(%arg0: i32) -> (i32, i32) {
    %c0_i32 = arith.constant 0 : i32
    %c0_i32_0 = arith.constant 0 : i32
    %c0_i32_1 = arith.constant 0 : i32
    return %c0_i32, %c0_i32_0 : i32, i32
  }
  func.func @transform_4(%arg0: i32) -> (i32, i32) {
    %c0_i32 = arith.constant 0 : i32
    %c0_i32_0 = arith.constant 0 : i32
    %c0_i32_1 = arith.constant 0 : i32
    return %c0_i32, %c0_i32_0 : i32, i32
  }
  func.func @transform_5(%arg0: i32) -> (i32, i32) {
    %c0_i32 = arith.constant 0 : i32
    %c0_i32_0 = arith.constant 0 : i32
    %c0_i32_1 = arith.constant 0 : i32
    return %c0_i32, %c0_i32_0 : i32, i32
  }
  func.func @transform_6(%arg0: i32) -> (i32, i32, i32) {
    %c0_i32 = arith.constant 0 : i32
    %c0_i32_0 = arith.constant 0 : i32
    %c0_i32_1 = arith.constant 0 : i32
    return %arg0, %c0_i32, %c0_i32_0 : i32, i32, i32
  }
  func.func @transform_7(%arg0: i32) -> (i32, i32, i32) {
    %c0_i32 = arith.constant 0 : i32
    %c0_i32_0 = arith.constant 0 : i32
    %c0_i32_1 = arith.constant 0 : i32
    return %arg0, %c0_i32, %c0_i32_0 : i32, i32, i32
  }
}

</mosaic_0001>

<llo_original>
// kernel: _lambda_.1
$region0: #{_lambda_.1}
  #allocation0 [shape = 'u32[]', space=smem, size = 0x4, offset = 0x4, fixed_abs, tag = 'smem constant byte address 0x4 - core index']
  #allocation1 [shape = 'u32[144,128]{1,0:T(1,128)}', space=vmem, size = 0x12000, scoped, tag = 'internal scratch']
  #allocation2 [shape = 'f32[8,128]{1,0:T(8,128)}', space=vmem, size = 0x1000, scoped, tag = 'scratch operand']
  %s0 = inlined_call_operand.vmem [shape: f32[8,8,8], index: 0, kind: input, shape index: {}]
  %s1 = inlined_call_operand.vmem [shape: f32[8,128], index: 1, kind: input, shape index: {}]
  %s2 = inlined_call_operand.vmem [shape: f32[1,128], index: 2, kind: input, shape index: {}]
  %s3 = inlined_call_operand.vmem [shape: f32[128,128], index: 3, kind: input, shape index: {}]
  %s4 = inlined_call_operand.vmem [shape: f32[128,128], index: 4, kind: input, shape index: {}]
  %s5 = inlined_call_operand.vmem [shape: f32[1,128], index: 5, kind: input, shape index: {}]
  %s6 = inlined_call_operand.vmem [shape: f32[8,8,128], index: 6, kind: output, shape index: {0}]
  %s7 = inlined_call_operand.vmem [shape: f32[8,8,128], index: 7, kind: output, shape index: {1}]
  %8 = xla_tuple %s6, %s7
  %s9 = sld [smem:[#allocation0]]
  $region46: #{_lambda_.1} parent=0
    _
  %s11 = ssub.s32 1, %s9
  %s12 = scalar_select 0, %s11, %s9
  // Predicated region
  $region2: #{_lambda_.1} parent=0 // pred_check
    _
  $region3: #{_lambda_.1} parent=0 // pred_check_branch
    %14 = sbr.rel (0) target = $region5
  $region4: #{_lambda_.1} parent=0 // pred_region
    _
  $region5: #{_lambda_.1} parent=0 // pred_fallthru
    _
  // Predicated region
  $region6: #{_lambda_.1} parent=0 // pred_check
    _
  $region7: #{_lambda_.1} parent=0 // pred_check_branch
    %16 = sbr.rel (0) target = $region9
  $region8: #{_lambda_.1} parent=0 // pred_region
    _
  $region9: #{_lambda_.1} parent=0 // pred_fallthru
    _
  // Predicated region
  $region10: #{_lambda_.1} parent=0 // pred_check
    _
  $region11: #{_lambda_.1} parent=0 // pred_check_branch
    %18 = sbr.rel (0) target = $region13
  $region12: #{_lambda_.1} parent=0 // pred_region
    _
  $region13: #{_lambda_.1} parent=0 // pred_fallthru
    _
  // Predicated region
  $region14: #{_lambda_.1} parent=0 // pred_check
    _
  $region15: #{_lambda_.1} parent=0 // pred_check_branch
    %20 = sbr.rel (0) target = $region17
  $region16: #{_lambda_.1} parent=0 // pred_region
    _
  $region17: #{_lambda_.1} parent=0 // pred_fallthru
    _
  // Predicated region
  $region18: #{_lambda_.1} parent=0 // pred_check
    _
  $region19: #{_lambda_.1} parent=0 // pred_check_branch
    %22 = sbr.rel (0) target = $region21
  $region20: #{_lambda_.1} parent=0 // pred_region
    _
  $region21: #{_lambda_.1} parent=0 // pred_fallthru
    _
  // Predicated region
  $region22: #{_lambda_.1} parent=0 // pred_check
    _
  $region23: #{_lambda_.1} parent=0 // pred_check_branch
    %24 = sbr.rel (0) target = $region25
  $region24: #{_lambda_.1} parent=0 // pred_region
    _
  $region25: #{_lambda_.1} parent=0 // pred_fallthru
    _
  %p25 = scmp.eq.s32.totalorder 0, 0
  // Predicated region
  $region26: #{_lambda_.1} parent=0 // pred_check
    %p26 = pneg %p25
  $region27: #{_lambda_.1} parent=0 // pred_check_branch
    %28 = sbr.rel (%p26) target = $region29
  $region28: #{_lambda_.1} parent=0 // pred_region
    %29 = vst [vmem:[#allocation2] sm:$0xff] 0.0
  $region29: #{_lambda_.1} parent=0 // pred_fallthru
    _
  %v30 = vld [vmem:[%s0] sm:$0xff]
  %v31 = vld [vmem:[%s0 + $0x8] sm:$0xff]
  %v32 = vld [vmem:[%s0 + $0x10] sm:$0xff]
  %v33 = vld [vmem:[%s0 + $0x18] sm:$0xff]
  %v34 = vld [vmem:[%s0 + $0x20] sm:$0xff]
  %v35 = vld [vmem:[%s0 + $0x28] sm:$0xff]
  %v36 = vld [vmem:[%s0 + $0x30] sm:$0xff]
  %v37 = vld [vmem:[%s0 + $0x38] sm:$0xff]
  %v38 = vld [vmem:[%s1] sm:$0xff]
  %v39 = vld [vmem:[%s2] sm:$0x1]
  %v41 = vlaneseq
  %v42 = vshrl.u32 %v41, 7
  %v43 = vsub.s32 0, %v42
  %v44 = vrot.slane %v39, %v43
  %vm46 = vcmask 64512
  %v48 = vsel %vm46, %v30, 0
  %v51 = vsel %vm46, %v31, 0
  %v54 = vsel %vm46, %v32, 0
  %v57 = vsel %vm46, %v33, 0
  %v60 = vsel %vm46, %v34, 0
  %v63 = vsel %vm46, %v35, 0
  %v66 = vsel %vm46, %v36, 0
  %v69 = vsel %vm46, %v37, 0
  %71 = vmatprep.subr.mxu0 0.0
  %72 = vmatpush1.msra.mxu0 %v38
  %73 = vmatprep.subr.mxu0 0.0
  %74 = vmatpush1.msra.mxu0 0.0
  %75 = vmatprep.subr.mxu0 0.0
  %76 = vmatpush1.msra.mxu0 0.0
  %77 = vmatprep.subr.mxu0 0.0
  %78 = vmatpush1.msra.mxu0 0.0
  %79 = vmatprep.subr.mxu0 0.0
  %80 = vmatpush1.msra.mxu0 0.0
  %81 = vmatprep.subr.mxu0 0.0
  %82 = vmatpush1.msra.mxu0 0.0
  %83 = vmatprep.subr.mxu0 0.0
  %84 = vmatpush1.msra.mxu0 0.0
  %85 = vmatprep.subr.mxu0 0.0
  %86 = vmatpush1.msra.mxu0 0.0
  %87 = vmatprep.subr.mxu0 0.0
  %88 = vmatpush1.msra.mxu0 0.0
  %89 = vmatprep.subr.mxu0 0.0
  %90 = vmatpush1.msra.mxu0 0.0
  %91 = vmatprep.subr.mxu0 0.0
  %92 = vmatpush1.msra.mxu0 0.0
  %93 = vmatprep.subr.mxu0 0.0
  %94 = vmatpush1.msra.mxu0 0.0
  %95 = vmatprep.subr.mxu0 0.0
  %96 = vmatpush1.msra.mxu0 0.0
  %97 = vmatprep.subr.mxu0 0.0
  %98 = vmatpush1.msra.mxu0 0.0
  %99 = vmatprep.subr.mxu0 0.0
  %100 = vmatpush1.msra.mxu0 0.0
  %101 = vmatprep.subr.mxu0 0.0
  %102 = vmatpush1.msra.mxu0 0.0
  %103 = vmatprep.subr.mxu0 0.0
  %104 = vmatpush1.msra.mxu0 0.0
  %105 = vmatprep.subr.mxu0 0.0
  %106 = vmatpush1.msra.mxu0 0.0
  %107 = vmatprep.subr.mxu0 0.0
  %108 = vmatpush1.msra.mxu0 0.0
  %109 = vmatprep.subr.mxu0 0.0
  %110 = vmatpush1.msra.mxu0 0.0
  %111 = vmatprep.subr.mxu0 0.0
  %112 = vmatpush1.msra.mxu0 0.0
  %113 = vmatprep.subr.mxu0 0.0
  %114 = vmatpush1.msra.mxu0 0.0
  %115 = vmatprep.subr.mxu0 0.0
  %116 = vmatpush1.msra.mxu0 0.0
  %117 = vmatprep.subr.mxu0 0.0
  %118 = vmatpush1.msra.mxu0 0.0
  %119 = vmatprep.subr.mxu0 0.0
  %120 = vmatpush1.msra.mxu0 0.0
  %121 = vmatprep.subr.mxu0 0.0
  %122 = vmatpush1.msra.mxu0 0.0
  %123 = vmatprep.subr.mxu0 0.0
  %124 = vmatpush1.msra.mxu0 0.0
  %125 = vmatprep.subr.mxu0 0.0
  %126 = vmatpush1.msra.mxu0 0.0
  %127 = vmatprep.subr.mxu0 0.0
  %128 = vmatpush1.msra.mxu0 0.0
  %129 = vmatprep.subr.mxu0 0.0
  %130 = vmatpush1.msra.mxu0 0.0
  %131 = vmatprep.subr.mxu0 0.0
  %132 = vmatpush1.msra.mxu0 0.0
  %133 = vmatprep.subr.mxu0 0.0
  %134 = vmatpush1.msra.mxu0 0.0
  %135 = vmatprep.mubr.f32.mxu0 0.0
  %136 = vmatmul.mubr.f32.gmra.mrb[0].mxu0 %v48
  %v137 = vpop.f32.mrb[0].mxu0
  %v138 = vadd.f32 %v44, %v137
  %v139 = vpop.f32.mrb[0].mxu0
  %140 = vmatprep.mubr.f32.mxu0 0.0
  %141 = vmatmul.mubr.f32.gmra.mrb[0].mxu0 %v51
  %v142 = vpop.f32.mrb[0].mxu0
  %v143 = vadd.f32 %v44, %v142
  %v144 = vpop.f32.mrb[0].mxu0
  %145 = vmatprep.mubr.f32.mxu0 0.0
  %146 = vmatmul.mubr.f32.gmra.mrb[0].mxu0 %v54
  %v147 = vpop.f32.mrb[0].mxu0
  %v148 = vadd.f32 %v44, %v147
  %v149 = vpop.f32.mrb[0].mxu0
  %150 = vmatprep.mubr.f32.mxu0 0.0
  %151 = vmatmul.mubr.f32.gmra.mrb[0].mxu0 %v57
  %v152 = vpop.f32.mrb[0].mxu0
  %v153 = vadd.f32 %v44, %v152
  %v154 = vpop.f32.mrb[0].mxu0
  %155 = vmatprep.mubr.f32.mxu0 0.0
  %156 = vmatmul.mubr.f32.gmra.mrb[0].mxu0 %v60
  %v157 = vpop.f32.mrb[0].mxu0
  %v158 = vadd.f32 %v44, %v157
  %v159 = vpop.f32.mrb[0].mxu0
  %160 = vmatprep.mubr.f32.mxu0 0.0
  %161 = vmatmul.mubr.f32.gmra.mrb[0].mxu0 %v63
  %v162 = vpop.f32.mrb[0].mxu0
  %v163 = vadd.f32 %v44, %v162
  %v164 = vpop.f32.mrb[0].mxu0
  %165 = vmatprep.mubr.f32.mxu0 0.0
  %166 = vmatmul.mubr.f32.gmra.mrb[0].mxu0 %v66
  %v167 = vpop.f32.mrb[0].mxu0
  %v168 = vadd.f32 %v44, %v167
  %v169 = vpop.f32.mrb[0].mxu0
  %170 = vmatprep.mubr.f32.mxu0 0.0
  %171 = vmatmul.mubr.f32.gmra.mrb[0].mxu0 %v69
  %v172 = vpop.f32.mrb[0].mxu0
  %v173 = vadd.f32 %v44, %v172
  %v174 = vpop.f32.mrb[0].mxu0
  %175 = vdwg.mxu0
  %176 = vst [vmem:[%s6] sm:$0xff] %v138
  %177 = vst [vmem:[%s6 + $0x8] sm:$0xff] %v143
  %178 = vst [vmem:[%s6 + $0x10] sm:$0xff] %v148
  %179 = vst [vmem:[%s6 + $0x18] sm:$0xff] %v153
  %180 = vst [vmem:[%s6 + $0x20] sm:$0xff] %v158
  %181 = vst [vmem:[%s6 + $0x28] sm:$0xff] %v163
  %182 = vst [vmem:[%s6 + $0x30] sm:$0xff] %v168
  %183 = vst [vmem:[%s6 + $0x38] sm:$0xff] %v173
  %v184 = vld [vmem:[%s3] sm:$0xff]
  %v185 = vld [vmem:[%s3 + $0x8] sm:$0xff]
  %v186 = vld [vmem:[%s3 + $0x10] sm:$0xff]
  %v187 = vld [vmem:[%s3 + $0x18] sm:$0xff]
  %v188 = vld [vmem:[%s3 + $0x20] sm:$0xff]
  %v189 = vld [vmem:[%s3 + $0x28] sm:$0xff]
  %v190 = vld [vmem:[%s3 + $0x30] sm:$0xff]
  %v191 = vld [vmem:[%s3 + $0x38] sm:$0xff]
  %v192 = vld [vmem:[%s3 + $0x40] sm:$0xff]
  %v193 = vld [vmem:[%s3 + $0x48] sm:$0xff]
  %v194 = vld [vmem:[%s3 + $0x50] sm:$0xff]
  %v195 = vld [vmem:[%s3 + $0x58] sm:$0xff]
  %v196 = vld [vmem:[%s3 + $0x60] sm:$0xff]
  %v197 = vld [vmem:[%s3 + $0x68] sm:$0xff]
  %v198 = vld [vmem:[%s3 + $0x70] sm:$0xff]
  %v199 = vld [vmem:[%s3 + $0x78] sm:$0xff]
  %v200 = vld [vmem:[#allocation2] sm:$0xff]
  %v201 = vld [vmem:[%s6] sm:$0xff]
  %202 = vmatprep.subr.mxu0 0.0
  %203 = vmatpush1.msra.mxu0 %v184
  %204 = vmatprep.subr.mxu0 0.0
  %205 = vmatpush1.msra.mxu0 %v185
  %206 = vmatprep.subr.mxu0 0.0
  %207 = vmatpush1.msra.mxu0 %v186
  %208 = vmatprep.subr.mxu0 0.0
  %209 = vmatpush1.msra.mxu0 %v187
  %210 = vmatprep.subr.mxu0 0.0
  %211 = vmatpush1.msra.mxu0 %v188
  %212 = vmatprep.subr.mxu0 0.0
  %213 = vmatpush1.msra.mxu0 %v189
  %214 = vmatprep.subr.mxu0 0.0
  %215 = vmatpush1.msra.mxu0 %v190
  %216 = vmatprep.subr.mxu0 0.0
  %217 = vmatpush1.msra.mxu0 %v191
  %218 = vmatprep.subr.mxu0 0.0
  %219 = vmatpush1.msra.mxu0 %v192
  %220 = vmatprep.subr.mxu0 0.0
  %221 = vmatpush1.msra.mxu0 %v193
  %222 = vmatprep.subr.mxu0 0.0
  %223 = vmatpush1.msra.mxu0 %v194
  %224 = vmatprep.subr.mxu0 0.0
  %225 = vmatpush1.msra.mxu0 %v195
  %226 = vmatprep.subr.mxu0 0.0
  %227 = vmatpush1.msra.mxu0 %v196
  %228 = vmatprep.subr.mxu0 0.0
  %229 = vmatpush1.msra.mxu0 %v197
  %230 = vmatprep.subr.mxu0 0.0
  %231 = vmatpush1.msra.mxu0 %v198
  %232 = vmatprep.subr.mxu0 0.0
  %233 = vmatpush1.msra.mxu0 %v199
  %234 = vmatprep.subr.mxu0 0.0
  %235 = vmatpush1.msra.mxu0 0.0
  %236 = vmatprep.subr.mxu0 0.0
  %237 = vmatpush1.msra.mxu0 0.0
  %238 = vmatprep.subr.mxu0 0.0
  %239 = vmatpush1.msra.mxu0 0.0
  %240 = vmatprep.subr.mxu0 0.0
  %241 = vmatpush1.msra.mxu0 0.0
  %242 = vmatprep.subr.mxu0 0.0
  %243 = vmatpush1.msra.mxu0 0.0
  %244 = vmatprep.subr.mxu0 0.0
  %245 = vmatpush1.msra.mxu0 0.0
  %246 = vmatprep.subr.mxu0 0.0
  %247 = vmatpush1.msra.mxu0 0.0
  %248 = vmatprep.subr.mxu0 0.0
  %249 = vmatpush1.msra.mxu0 0.0
  %250 = vmatprep.subr.mxu0 0.0
  %251 = vmatpush1.msra.mxu0 0.0
  %252 = vmatprep.subr.mxu0 0.0
  %253 = vmatpush1.msra.mxu0 0.0
  %254 = vmatprep.subr.mxu0 0.0
  %255 = vmatpush1.msra.mxu0 0.0
  %256 = vmatprep.subr.mxu0 0.0
  %257 = vmatpush1.msra.mxu0 0.0
  %258 = vmatprep.subr.mxu0 0.0
  %259 = vmatpush1.msra.mxu0 0.0
  %260 = vmatprep.subr.mxu0 0.0
  %261 = vmatpush1.msra.mxu0 0.0
  %262 = vmatprep.subr.mxu0 0.0
  %263 = vmatpush1.msra.mxu0 0.0
  %264 = vmatprep.subr.mxu0 0.0
  %265 = vmatpush1.msra.mxu0 0.0
  %266 = vmatprep.mubr.f32.mxu0 0.0
  %267 = vmatmul.mubr.f32.gmra.mrb[0].mxu0 %v200
  %v268 = vpop.f32.mrb[0].mxu0
  %v269 = vadd.f32 0.0, %v268
  %v270 = vpop.f32.mrb[0].mxu0
  %271 = vdwg.mxu0
  %v272 = vadd.f32 %v201, %v269
  %v273 = vmax.f32 %v272, 0.0
  %274 = vst [vmem:[%s6] sm:$0xff] %v273
  %s275 = scalar_lea.vmem %s6, 8
  %v276 = vld [vmem:[%s275] sm:$0xff]
  %277 = vmatprep.subr.mxu0 0.0
  %278 = vmatpush1.msra.mxu0 %v184
  %279 = vmatprep.subr.mxu0 0.0
  %280 = vmatpush1.msra.mxu0 %v185
  %281 = vmatprep.subr.mxu0 0.0
  %282 = vmatpush1.msra.mxu0 %v186
  %283 = vmatprep.subr.mxu0 0.0
  %284 = vmatpush1.msra.mxu0 %v187
  %285 = vmatprep.subr.mxu0 0.0
  %286 = vmatpush1.msra.mxu0 %v188
  %287 = vmatprep.subr.mxu0 0.0
  %288 = vmatpush1.msra.mxu0 %v189
  %289 = vmatprep.subr.mxu0 0.0
  %290 = vmatpush1.msra.mxu0 %v190
  %291 = vmatprep.subr.mxu0 0.0
  %292 = vmatpush1.msra.mxu0 %v191
  %293 = vmatprep.subr.mxu0 0.0
  %294 = vmatpush1.msra.mxu0 %v192
  %295 = vmatprep.subr.mxu0 0.0
  %296 = vmatpush1.msra.mxu0 %v193
  %297 = vmatprep.subr.mxu0 0.0
  %298 = vmatpush1.msra.mxu0 %v194
  %299 = vmatprep.subr.mxu0 0.0
  %300 = vmatpush1.msra.mxu0 %v195
  %301 = vmatprep.subr.mxu0 0.0
  %302 = vmatpush1.msra.mxu0 %v196
  %303 = vmatprep.subr.mxu0 0.0
  %304 = vmatpush1.msra.mxu0 %v197
  %305 = vmatprep.subr.mxu0 0.0
  %306 = vmatpush1.msra.mxu0 %v198
  %307 = vmatprep.subr.mxu0 0.0
  %308 = vmatpush1.msra.mxu0 %v199
  %309 = vmatprep.subr.mxu0 0.0
  %310 = vmatpush1.msra.mxu0 0.0
  %311 = vmatprep.subr.mxu0 0.0
  %312 = vmatpush1.msra.mxu0 0.0
  %313 = vmatprep.subr.mxu0 0.0
  %314 = vmatpush1.msra.mxu0 0.0
  %315 = vmatprep.subr.mxu0 0.0
  %316 = vmatpush1.msra.mxu0 0.0
  %317 = vmatprep.subr.mxu0 0.0
  %318 = vmatpush1.msra.mxu0 0.0
  %319 = vmatprep.subr.mxu0 0.0
  %320 = vmatpush1.msra.mxu0 0.0
  %321 = vmatprep.subr.mxu0 0.0
  %322 = vmatpush1.msra.mxu0 0.0
  %323 = vmatprep.subr.mxu0 0.0
  %324 = vmatpush1.msra.mxu0 0.0
  %325 = vmatprep.subr.mxu0 0.0
  %326 = vmatpush1.msra.mxu0 0.0
  %327 = vmatprep.subr.mxu0 0.0
  %328 = vmatpush1.msra.mxu0 0.0
  %329 = vmatprep.subr.mxu0 0.0
  %330 = vmatpush1.msra.mxu0 0.0
  %331 = vmatprep.subr.mxu0 0.0
  %332 = vmatpush1.msra.mxu0 0.0
  %333 = vmatprep.subr.mxu0 0.0
  %334 = vmatpush1.msra.mxu0 0.0
  %335 = vmatprep.subr.mxu0 0.0
  %336 = vmatpush1.msra.mxu0 0.0
  %337 = vmatprep.subr.mxu0 0.0
  %338 = vmatpush1.msra.mxu0 0.0
  %339 = vmatprep.subr.mxu0 0.0
  %340 = vmatpush1.msra.mxu0 0.0
  %341 = vmatprep.mubr.f32.mxu0 0.0
  %342 = vmatmul.mubr.f32.gmra.mrb[0].mxu0 %v273
  %v343 = vpop.f32.mrb[0].mxu0
  %v344 = vadd.f32 0.0, %v343
  %v345 = vpop.f32.mrb[0].mxu0
  %346 = vdwg.mxu0
  %v347 = vadd.f32 %v276, %v344
  %v348 = vmax.f32 %v347, 0.0
  %349 = vst [vmem:[%s275] sm:$0xff] %v348
  %s350 = scalar_lea.vmem %s6, 16
  %v351 = vld [vmem:[%s350] sm:$0xff]
  %352 = vmatprep.subr.mxu0 0.0
  %353 = vmatpush1.msra.mxu0 %v184
  %354 = vmatprep.subr.mxu0 0.0
  %355 = vmatpush1.msra.mxu0 %v185
  %356 = vmatprep.subr.mxu0 0.0
  %357 = vmatpush1.msra.mxu0 %v186
  %358 = vmatprep.subr.mxu0 0.0
  %359 = vmatpush1.msra.mxu0 %v187
  %360 = vmatprep.subr.mxu0 0.0
  %361 = vmatpush1.msra.mxu0 %v188
  %362 = vmatprep.subr.mxu0 0.0
  %363 = vmatpush1.msra.mxu0 %v189
  %364 = vmatprep.subr.mxu0 0.0
  %365 = vmatpush1.msra.mxu0 %v190
  %366 = vmatprep.subr.mxu0 0.0
  %367 = vmatpush1.msra.mxu0 %v191
  %368 = vmatprep.subr.mxu0 0.0
  %369 = vmatpush1.msra.mxu0 %v192
  %370 = vmatprep.subr.mxu0 0.0
  %371 = vmatpush1.msra.mxu0 %v193
  %372 = vmatprep.subr.mxu0 0.0
  %373 = vmatpush1.msra.mxu0 %v194
  %374 = vmatprep.subr.mxu0 0.0
  %375 = vmatpush1.msra.mxu0 %v195
  %376 = vmatprep.subr.mxu0 0.0
  %377 = vmatpush1.msra.mxu0 %v196
  %378 = vmatprep.subr.mxu0 0.0
  %379 = vmatpush1.msra.mxu0 %v197
  %380 = vmatprep.subr.mxu0 0.0
  %381 = vmatpush1.msra.mxu0 %v198
  %382 = vmatprep.subr.mxu0 0.0
  %383 = vmatpush1.msra.mxu0 %v199
  %384 = vmatprep.subr.mxu0 0.0
  %385 = vmatpush1.msra.mxu0 0.0
  %386 = vmatprep.subr.mxu0 0.0
  %387 = vmatpush1.msra.mxu0 0.0
  %388 = vmatprep.subr.mxu0 0.0
  %389 = vmatpush1.msra.mxu0 0.0
  %390 = vmatprep.subr.mxu0 0.0
  %391 = vmatpush1.msra.mxu0 0.0
  %392 = vmatprep.subr.mxu0 0.0
  %393 = vmatpush1.msra.mxu0 0.0
  %394 = vmatprep.subr.mxu0 0.0
  %395 = vmatpush1.msra.mxu0 0.0
  %396 = vmatprep.subr.mxu0 0.0
  %397 = vmatpush1.msra.mxu0 0.0
  %398 = vmatprep.subr.mxu0 0.0
  %399 = vmatpush1.msra.mxu0 0.0
  %400 = vmatprep.subr.mxu0 0.0
  %401 = vmatpush1.msra.mxu0 0.0
  %402 = vmatprep.subr.mxu0 0.0
  %403 = vmatpush1.msra.mxu0 0.0
  %404 = vmatprep.subr.mxu0 0.0
  %405 = vmatpush1.msra.mxu0 0.0
  %406 = vmatprep.subr.mxu0 0.0
  %407 = vmatpush1.msra.mxu0 0.0
  %408 = vmatprep.subr.mxu0 0.0
  %409 = vmatpush1.msra.mxu0 0.0
  %410 = vmatprep.subr.mxu0 0.0
  %411 = vmatpush1.msra.mxu0 0.0
  %412 = vmatprep.subr.mxu0 0.0
  %413 = vmatpush1.msra.mxu0 0.0
  %414 = vmatprep.subr.mxu0 0.0
  %415 = vmatpush1.msra.mxu0 0.0
  %416 = vmatprep.mubr.f32.mxu0 0.0
  %417 = vmatmul.mubr.f32.gmra.mrb[0].mxu0 %v348
  %v418 = vpop.f32.mrb[0].mxu0
  %v419 = vadd.f32 0.0, %v418
  %v420 = vpop.f32.mrb[0].mxu0
  %421 = vdwg.mxu0
  %v422 = vadd.f32 %v351, %v419
  %v423 = vmax.f32 %v422, 0.0
  %424 = vst [vmem:[%s350] sm:$0xff] %v423
  %s425 = scalar_lea.vmem %s6, 24
  %v426 = vld [vmem:[%s425] sm:$0xff]
  %427 = vmatprep.subr.mxu0 0.0
  %428 = vmatpush1.msra.mxu0 %v184
  %429 = vmatprep.subr.mxu0 0.0
  %430 = vmatpush1.msra.mxu0 %v185
  %431 = vmatprep.subr.mxu0 0.0
  %432 = vmatpush1.msra.mxu0 %v186
  %433 = vmatprep.subr.mxu0 0.0
  %434 = vmatpush1.msra.mxu0 %v187
  %435 = vmatprep.subr.mxu0 0.0
  %436 = vmatpush1.msra.mxu0 %v188
  %437 = vmatprep.subr.mxu0 0.0
  %438 = vmatpush1.msra.mxu0 %v189
  %439 = vmatprep.subr.mxu0 0.0
  %440 = vmatpush1.msra.mxu0 %v190
  %441 = vmatprep.subr.mxu0 0.0
  %442 = vmatpush1.msra.mxu0 %v191
  %443 = vmatprep.subr.mxu0 0.0
  %444 = vmatpush1.msra.mxu0 %v192
  %445 = vmatprep.subr.mxu0 0.0
  %446 = vmatpush1.msra.mxu0 %v193
  %447 = vmatprep.subr.mxu0 0.0
  %448 = vmatpush1.msra.mxu0 %v194
  %449 = vmatprep.subr.mxu0 0.0
  %450 = vmatpush1.msra.mxu0 %v195
  %451 = vmatprep.subr.mxu0 0.0
  %452 = vmatpush1.msra.mxu0 %v196
  %453 = vmatprep.subr.mxu0 0.0
  %454 = vmatpush1.msra.mxu0 %v197
  %455 = vmatprep.subr.mxu0 0.0
  %456 = vmatpush1.msra.mxu0 %v198
  %457 = vmatprep.subr.mxu0 0.0
  %458 = vmatpush1.msra.mxu0 %v199
  %459 = vmatprep.subr.mxu0 0.0
  %460 = vmatpush1.msra.mxu0 0.0
  %461 = vmatprep.subr.mxu0 0.0
  %462 = vmatpush1.msra.mxu0 0.0
  %463 = vmatprep.subr.mxu0 0.0
  %464 = vmatpush1.msra.mxu0 0.0
  %465 = vmatprep.subr.mxu0 0.0
  %466 = vmatpush1.msra.mxu0 0.0
  %467 = vmatprep.subr.mxu0 0.0
  %468 = vmatpush1.msra.mxu0 0.0
  %469 = vmatprep.subr.mxu0 0.0
  %470 = vmatpush1.msra.mxu0 0.0
  %471 = vmatprep.subr.mxu0 0.0
  %472 = vmatpush1.msra.mxu0 0.0
  %473 = vmatprep.subr.mxu0 0.0
  %474 = vmatpush1.msra.mxu0 0.0
  %475 = vmatprep.subr.mxu0 0.0
  %476 = vmatpush1.msra.mxu0 0.0
  %477 = vmatprep.subr.mxu0 0.0
  %478 = vmatpush1.msra.mxu0 0.0
  %479 = vmatprep.subr.mxu0 0.0
  %480 = vmatpush1.msra.mxu0 0.0
  %481 = vmatprep.subr.mxu0 0.0
  %482 = vmatpush1.msra.mxu0 0.0
  %483 = vmatprep.subr.mxu0 0.0
  %484 = vmatpush1.msra.mxu0 0.0
  %485 = vmatprep.subr.mxu0 0.0
  %486 = vmatpush1.msra.mxu0 0.0
  %487 = vmatprep.subr.mxu0 0.0
  %488 = vmatpush1.msra.mxu0 0.0
  %489 = vmatprep.subr.mxu0 0.0
  %490 = vmatpush1.msra.mxu0 0.0
  %491 = vmatprep.mubr.f32.mxu0 0.0
  %492 = vmatmul.mubr.f32.gmra.mrb[0].mxu0 %v423
  %v493 = vpop.f32.mrb[0].mxu0
  %v494 = vadd.f32 0.0, %v493
  %v495 = vpop.f32.mrb[0].mxu0
  %496 = vdwg.mxu0
  %v497 = vadd.f32 %v426, %v494
  %v498 = vmax.f32 %v497, 0.0
  %499 = vst [vmem:[%s425] sm:$0xff] %v498
  %s500 = scalar_lea.vmem %s6, 32
  %v501 = vld [vmem:[%s500] sm:$0xff]
  %502 = vmatprep.subr.mxu0 0.0
  %503 = vmatpush1.msra.mxu0 %v184
  %504 = vmatprep.subr.mxu0 0.0
  %505 = vmatpush1.msra.mxu0 %v185
  %506 = vmatprep.subr.mxu0 0.0
  %507 = vmatpush1.msra.mxu0 %v186
  %508 = vmatprep.subr.mxu0 0.0
  %509 = vmatpush1.msra.mxu0 %v187
  %510 = vmatprep.subr.mxu0 0.0
  %511 = vmatpush1.msra.mxu0 %v188
  %512 = vmatprep.subr.mxu0 0.0
  %513 = vmatpush1.msra.mxu0 %v189
  %514 = vmatprep.subr.mxu0 0.0
  %515 = vmatpush1.msra.mxu0 %v190
  %516 = vmatprep.subr.mxu0 0.0
  %517 = vmatpush1.msra.mxu0 %v191
  %518 = vmatprep.subr.mxu0 0.0
  %519 = vmatpush1.msra.mxu0 %v192
  %520 = vmatprep.subr.mxu0 0.0
  %521 = vmatpush1.msra.mxu0 %v193
  %522 = vmatprep.subr.mxu0 0.0
  %523 = vmatpush1.msra.mxu0 %v194
  %524 = vmatprep.subr.mxu0 0.0
  %525 = vmatpush1.msra.mxu0 %v195
  %526 = vmatprep.subr.mxu0 0.0
  %527 = vmatpush1.msra.mxu0 %v196
  %528 = vmatprep.subr.mxu0 0.0
  %529 = vmatpush1.msra.mxu0 %v197
  %530 = vmatprep.subr.mxu0 0.0
  %531 = vmatpush1.msra.mxu0 %v198
  %532 = vmatprep.subr.mxu0 0.0
  %533 = vmatpush1.msra.mxu0 %v199
  %534 = vmatprep.subr.mxu0 0.0
  %535 = vmatpush1.msra.mxu0 0.0
  %536 = vmatprep.subr.mxu0 0.0
  %537 = vmatpush1.msra.mxu0 0.0
  %538 = vmatprep.subr.mxu0 0.0
  %539 = vmatpush1.msra.mxu0 0.0
  %540 = vmatprep.subr.mxu0 0.0
  %541 = vmatpush1.msra.mxu0 0.0
  %542 = vmatprep.subr.mxu0 0.0
  %543 = vmatpush1.msra.mxu0 0.0
  %544 = vmatprep.subr.mxu0 0.0
  %545 = vmatpush1.msra.mxu0 0.0
  %546 = vmatprep.subr.mxu0 0.0
  %547 = vmatpush1.msra.mxu0 0.0
  %548 = vmatprep.subr.mxu0 0.0
  %549 = vmatpush1.msra.mxu0 0.0
  %550 = vmatprep.subr.mxu0 0.0
  %551 = vmatpush1.msra.mxu0 0.0
  %552 = vmatprep.subr.mxu0 0.0
  %553 = vmatpush1.msra.mxu0 0.0
  %554 = vmatprep.subr.mxu0 0.0
  %555 = vmatpush1.msra.mxu0 0.0
  %556 = vmatprep.subr.mxu0 0.0
  %557 = vmatpush1.msra.mxu0 0.0
  %558 = vmatprep.subr.mxu0 0.0
  %559 = vmatpush1.msra.mxu0 0.0
  %560 = vmatprep.subr.mxu0 0.0
  %561 = vmatpush1.msra.mxu0 0.0
  %562 = vmatprep.subr.mxu0 0.0
  %563 = vmatpush1.msra.mxu0 0.0
  %564 = vmatprep.subr.mxu0 0.0
  %565 = vmatpush1.msra.mxu0 0.0
  %566 = vmatprep.mubr.f32.mxu0 0.0
  %567 = vmatmul.mubr.f32.gmra.mrb[0].mxu0 %v498
  %v568 = vpop.f32.mrb[0].mxu0
  %v569 = vadd.f32 0.0, %v568
  %v570 = vpop.f32.mrb[0].mxu0
  %571 = vdwg.mxu0
  %v572 = vadd.f32 %v501, %v569
  %v573 = vmax.f32 %v572, 0.0
  %574 = vst [vmem:[%s500] sm:$0xff] %v573
  %s575 = scalar_lea.vmem %s6, 40
  %v576 = vld [vmem:[%s575] sm:$0xff]
  %577 = vmatprep.subr.mxu0 0.0
  %578 = vmatpush1.msra.mxu0 %v184
  %579 = vmatprep.subr.mxu0 0.0
  %580 = vmatpush1.msra.mxu0 %v185
  %581 = vmatprep.subr.mxu0 0.0
  %582 = vmatpush1.msra.mxu0 %v186
  %583 = vmatprep.subr.mxu0 0.0
  %584 = vmatpush1.msra.mxu0 %v187
  %585 = vmatprep.subr.mxu0 0.0
  %586 = vmatpush1.msra.mxu0 %v188
  %587 = vmatprep.subr.mxu0 0.0
  %588 = vmatpush1.msra.mxu0 %v189
  %589 = vmatprep.subr.mxu0 0.0
  %590 = vmatpush1.msra.mxu0 %v190
  %591 = vmatprep.subr.mxu0 0.0
  %592 = vmatpush1.msra.mxu0 %v191
  %593 = vmatprep.subr.mxu0 0.0
  %594 = vmatpush1.msra.mxu0 %v192
  %595 = vmatprep.subr.mxu0 0.0
  %596 = vmatpush1.msra.mxu0 %v193
  %597 = vmatprep.subr.mxu0 0.0
  %598 = vmatpush1.msra.mxu0 %v194
  %599 = vmatprep.subr.mxu0 0.0
  %600 = vmatpush1.msra.mxu0 %v195
  %601 = vmatprep.subr.mxu0 0.0
  %602 = vmatpush1.msra.mxu0 %v196
  %603 = vmatprep.subr.mxu0 0.0
  %604 = vmatpush1.msra.mxu0 %v197
  %605 = vmatprep.subr.mxu0 0.0
  %606 = vmatpush1.msra.mxu0 %v198
  %607 = vmatprep.subr.mxu0 0.0
  %608 = vmatpush1.msra.mxu0 %v199
  %609 = vmatprep.subr.mxu0 0.0
  %610 = vmatpush1.msra.mxu0 0.0
  %611 = vmatprep.subr.mxu0 0.0
  %612 = vmatpush1.msra.mxu0 0.0
  %613 = vmatprep.subr.mxu0 0.0
  %614 = vmatpush1.msra.mxu0 0.0
  %615 = vmatprep.subr.mxu0 0.0
  %616 = vmatpush1.msra.mxu0 0.0
  %617 = vmatprep.subr.mxu0 0.0
  %618 = vmatpush1.msra.mxu0 0.0
  %619 = vmatprep.subr.mxu0 0.0
  %620 = vmatpush1.msra.mxu0 0.0
  %621 = vmatprep.subr.mxu0 0.0
  %622 = vmatpush1.msra.mxu0 0.0
  %623 = vmatprep.subr.mxu0 0.0
  %624 = vmatpush1.msra.mxu0 0.0
  %625 = vmatprep.subr.mxu0 0.0
  %626 = vmatpush1.msra.mxu0 0.0
  %627 = vmatprep.subr.mxu0 0.0
  %628 = vmatpush1.msra.mxu0 0.0
  %629 = vmatprep.subr.mxu0 0.0
  %630 = vmatpush1.msra.mxu0 0.0
  %631 = vmatprep.subr.mxu0 0.0
  %632 = vmatpush1.msra.mxu0 0.0
  %633 = vmatprep.subr.mxu0 0.0
  %634 = vmatpush1.msra.mxu0 0.0
  %635 = vmatprep.subr.mxu0 0.0
  %636 = vmatpush1.msra.mxu0 0.0
  %637 = vmatprep.subr.mxu0 0.0
  %638 = vmatpush1.msra.mxu0 0.0
  %639 = vmatprep.subr.mxu0 0.0
  %640 = vmatpush1.msra.mxu0 0.0
  %641 = vmatprep.mubr.f32.mxu0 0.0
  %642 = vmatmul.mubr.f32.gmra.mrb[0].mxu0 %v573
  %v643 = vpop.f32.mrb[0].mxu0
  %v644 = vadd.f32 0.0, %v643
  %v645 = vpop.f32.mrb[0].mxu0
  %646 = vdwg.mxu0
  %v647 = vadd.f32 %v576, %v644
  %v648 = vmax.f32 %v647, 0.0
  %649 = vst [vmem:[%s575] sm:$0xff] %v648
  %s650 = scalar_lea.vmem %s6, 48
  %v651 = vld [vmem:[%s650] sm:$0xff]
  %652 = vmatprep.subr.mxu0 0.0
  %653 = vmatpush1.msra.mxu0 %v184
  %654 = vmatprep.subr.mxu0 0.0
  %655 = vmatpush1.msra.mxu0 %v185
  %656 = vmatprep.subr.mxu0 0.0
  %657 = vmatpush1.msra.mxu0 %v186
  %658 = vmatprep.subr.mxu0 0.0
  %659 = vmatpush1.msra.mxu0 %v187
  %660 = vmatprep.subr.mxu0 0.0
  %661 = vmatpush1.msra.mxu0 %v188
  %662 = vmatprep.subr.mxu0 0.0
  %663 = vmatpush1.msra.mxu0 %v189
  %664 = vmatprep.subr.mxu0 0.0
  %665 = vmatpush1.msra.mxu0 %v190
  %666 = vmatprep.subr.mxu0 0.0
  %667 = vmatpush1.msra.mxu0 %v191
  %668 = vmatprep.subr.mxu0 0.0
  %669 = vmatpush1.msra.mxu0 %v192
  %670 = vmatprep.subr.mxu0 0.0
  %671 = vmatpush1.msra.mxu0 %v193
  %672 = vmatprep.subr.mxu0 0.0
  %673 = vmatpush1.msra.mxu0 %v194
  %674 = vmatprep.subr.mxu0 0.0
  %675 = vmatpush1.msra.mxu0 %v195
  %676 = vmatprep.subr.mxu0 0.0
  %677 = vmatpush1.msra.mxu0 %v196
  %678 = vmatprep.subr.mxu0 0.0
  %679 = vmatpush1.msra.mxu0 %v197
  %680 = vmatprep.subr.mxu0 0.0
  %681 = vmatpush1.msra.mxu0 %v198
  %682 = vmatprep.subr.mxu0 0.0
  %683 = vmatpush1.msra.mxu0 %v199
  %684 = vmatprep.subr.mxu0 0.0
  %685 = vmatpush1.msra.mxu0 0.0
  %686 = vmatprep.subr.mxu0 0.0
  %687 = vmatpush1.msra.mxu0 0.0
  %688 = vmatprep.subr.mxu0 0.0
  %689 = vmatpush1.msra.mxu0 0.0
  %690 = vmatprep.subr.mxu0 0.0
  %691 = vmatpush1.msra.mxu0 0.0
  %692 = vmatprep.subr.mxu0 0.0
  %693 = vmatpush1.msra.mxu0 0.0
  %694 = vmatprep.subr.mxu0 0.0
  %695 = vmatpush1.msra.mxu0 0.0
  %696 = vmatprep.subr.mxu0 0.0
  %697 = vmatpush1.msra.mxu0 0.0
  %698 = vmatprep.subr.mxu0 0.0
  %699 = vmatpush1.msra.mxu0 0.0
  %700 = vmatprep.subr.mxu0 0.0
  %701 = vmatpush1.msra.mxu0 0.0
  %702 = vmatprep.subr.mxu0 0.0
  %703 = vmatpush1.msra.mxu0 0.0
  %704 = vmatprep.subr.mxu0 0.0
  %705 = vmatpush1.msra.mxu0 0.0
  %706 = vmatprep.subr.mxu0 0.0
  %707 = vmatpush1.msra.mxu0 0.0
  %708 = vmatprep.subr.mxu0 0.0
  %709 = vmatpush1.msra.mxu0 0.0
  %710 = vmatprep.subr.mxu0 0.0
  %711 = vmatpush1.msra.mxu0 0.0
  %712 = vmatprep.subr.mxu0 0.0
  %713 = vmatpush1.msra.mxu0 0.0
  %714 = vmatprep.subr.mxu0 0.0
  %715 = vmatpush1.msra.mxu0 0.0
  %716 = vmatprep.mubr.f32.mxu0 0.0
  %717 = vmatmul.mubr.f32.gmra.mrb[0].mxu0 %v648
  %v718 = vpop.f32.mrb[0].mxu0
  %v719 = vadd.f32 0.0, %v718
  %v720 = vpop.f32.mrb[0].mxu0
  %721 = vdwg.mxu0
  %v722 = vadd.f32 %v651, %v719
  %v723 = vmax.f32 %v722, 0.0
  %724 = vst [vmem:[%s650] sm:$0xff] %v723
  %s725 = scalar_lea.vmem %s6, 56
  %v726 = vld [vmem:[%s725] sm:$0xff]
  %727 = vmatprep.subr.mxu0 0.0
  %728 = vmatpush1.msra.mxu0 %v184
  %729 = vmatprep.subr.mxu0 0.0
  %730 = vmatpush1.msra.mxu0 %v185
  %731 = vmatprep.subr.mxu0 0.0
  %732 = vmatpush1.msra.mxu0 %v186
  %733 = vmatprep.subr.mxu0 0.0
  %734 = vmatpush1.msra.mxu0 %v187
  %735 = vmatprep.subr.mxu0 0.0
  %736 = vmatpush1.msra.mxu0 %v188
  %737 = vmatprep.subr.mxu0 0.0
  %738 = vmatpush1.msra.mxu0 %v189
  %739 = vmatprep.subr.mxu0 0.0
  %740 = vmatpush1.msra.mxu0 %v190
  %741 = vmatprep.subr.mxu0 0.0
  %742 = vmatpush1.msra.mxu0 %v191
  %743 = vmatprep.subr.mxu0 0.0
  %744 = vmatpush1.msra.mxu0 %v192
  %745 = vmatprep.subr.mxu0 0.0
  %746 = vmatpush1.msra.mxu0 %v193
  %747 = vmatprep.subr.mxu0 0.0
  %748 = vmatpush1.msra.mxu0 %v194
  %749 = vmatprep.subr.mxu0 0.0
  %750 = vmatpush1.msra.mxu0 %v195
  %751 = vmatprep.subr.mxu0 0.0
  %752 = vmatpush1.msra.mxu0 %v196
  %753 = vmatprep.subr.mxu0 0.0
  %754 = vmatpush1.msra.mxu0 %v197
  %755 = vmatprep.subr.mxu0 0.0
  %756 = vmatpush1.msra.mxu0 %v198
  %757 = vmatprep.subr.mxu0 0.0
  %758 = vmatpush1.msra.mxu0 %v199
  %759 = vmatprep.subr.mxu0 0.0
  %760 = vmatpush1.msra.mxu0 0.0
  %761 = vmatprep.subr.mxu0 0.0
  %762 = vmatpush1.msra.mxu0 0.0
  %763 = vmatprep.subr.mxu0 0.0
  %764 = vmatpush1.msra.mxu0 0.0
  %765 = vmatprep.subr.mxu0 0.0
  %766 = vmatpush1.msra.mxu0 0.0
  %767 = vmatprep.subr.mxu0 0.0
  %768 = vmatpush1.msra.mxu0 0.0
  %769 = vmatprep.subr.mxu0 0.0
  %770 = vmatpush1.msra.mxu0 0.0
  %771 = vmatprep.subr.mxu0 0.0
  %772 = vmatpush1.msra.mxu0 0.0
  %773 = vmatprep.subr.mxu0 0.0
  %774 = vmatpush1.msra.mxu0 0.0
  %775 = vmatprep.subr.mxu0 0.0
  %776 = vmatpush1.msra.mxu0 0.0
  %777 = vmatprep.subr.mxu0 0.0
  %778 = vmatpush1.msra.mxu0 0.0
  %779 = vmatprep.subr.mxu0 0.0
  %780 = vmatpush1.msra.mxu0 0.0
  %781 = vmatprep.subr.mxu0 0.0
  %782 = vmatpush1.msra.mxu0 0.0
  %783 = vmatprep.subr.mxu0 0.0
  %784 = vmatpush1.msra.mxu0 0.0
  %785 = vmatprep.subr.mxu0 0.0
  %786 = vmatpush1.msra.mxu0 0.0
  %787 = vmatprep.subr.mxu0 0.0
  %788 = vmatpush1.msra.mxu0 0.0
  %789 = vmatprep.subr.mxu0 0.0
  %790 = vmatpush1.msra.mxu0 0.0
  %791 = vmatprep.mubr.f32.mxu0 0.0
  %792 = vmatmul.mubr.f32.gmra.mrb[0].mxu0 %v723
  %v793 = vpop.f32.mrb[0].mxu0
  %v794 = vadd.f32 0.0, %v793
  %v795 = vpop.f32.mrb[0].mxu0
  %796 = vdwg.mxu0
  %v797 = vadd.f32 %v726, %v794
  %v798 = vmax.f32 %v797, 0.0
  %799 = vst [vmem:[%s725] sm:$0xff] %v798
  %800 = vst [vmem:[#allocation2] sm:$0xff] %v798
  %v801 = vld [vmem:[%s6] sm:$0xff]
  %v802 = vld [vmem:[%s6 + $0x8] sm:$0xff]
  %v803 = vld [vmem:[%s6 + $0x10] sm:$0xff]
  %v804 = vld [vmem:[%s6 + $0x18] sm:$0xff]
  %v805 = vld [vmem:[%s6 + $0x20] sm:$0xff]
  %v806 = vld [vmem:[%s6 + $0x28] sm:$0xff]
  %v807 = vld [vmem:[%s6 + $0x30] sm:$0xff]
  %v808 = vld [vmem:[%s6 + $0x38] sm:$0xff]
  %v809 = vld [vmem:[%s4] sm:$0xff]
  %v810 = vld [vmem:[%s4 + $0x8] sm:$0xff]
  %v811 = vld [vmem:[%s4 + $0x10] sm:$0xff]
  %v812 = vld [vmem:[%s4 + $0x18] sm:$0xff]
  %v813 = vld [vmem:[%s4 + $0x20] sm:$0xff]
  %v814 = vld [vmem:[%s4 + $0x28] sm:$0xff]
  %v815 = vld [vmem:[%s4 + $0x30] sm:$0xff]
  %v816 = vld [vmem:[%s4 + $0x38] sm:$0xff]
  %v817 = vld [vmem:[%s4 + $0x40] sm:$0xff]
  %v818 = vld [vmem:[%s4 + $0x48] sm:$0xff]
  %v819 = vld [vmem:[%s4 + $0x50] sm:$0xff]
  %v820 = vld [vmem:[%s4 + $0x58] sm:$0xff]
  %v821 = vld [vmem:[%s4 + $0x60] sm:$0xff]
  %v822 = vld [vmem:[%s4 + $0x68] sm:$0xff]
  %v823 = vld [vmem:[%s4 + $0x70] sm:$0xff]
  %v824 = vld [vmem:[%s4 + $0x78] sm:$0xff]
  %v825 = vld [vmem:[%s5] sm:$0x1]
  %v827 = vlaneseq
  %v828 = vshrl.u32 %v827, 7
  %v829 = vsub.s32 0, %v828
  %v830 = vrot.slane %v825, %v829
  %832 = vmatprep.subr.mxu0 0.0
  %833 = vmatpush1.msra.mxu0 %v809
  %834 = vmatprep.subr.mxu0 0.0
  %835 = vmatpush1.msra.mxu0 %v810
  %836 = vmatprep.subr.mxu0 0.0
  %837 = vmatpush1.msra.mxu0 %v811
  %838 = vmatprep.subr.mxu0 0.0
  %839 = vmatpush1.msra.mxu0 %v812
  %840 = vmatprep.subr.mxu0 0.0
  %841 = vmatpush1.msra.mxu0 %v813
  %842 = vmatprep.subr.mxu0 0.0
  %843 = vmatpush1.msra.mxu0 %v814
  %844 = vmatprep.subr.mxu0 0.0
  %845 = vmatpush1.msra.mxu0 %v815
  %846 = vmatprep.subr.mxu0 0.0
  %847 = vmatpush1.msra.mxu0 %v816
  %848 = vmatprep.subr.mxu0 0.0
  %849 = vmatpush1.msra.mxu0 %v817
  %850 = vmatprep.subr.mxu0 0.0
  %851 = vmatpush1.msra.mxu0 %v818
  %852 = vmatprep.subr.mxu0 0.0
  %853 = vmatpush1.msra.mxu0 %v819
  %854 = vmatprep.subr.mxu0 0.0
  %855 = vmatpush1.msra.mxu0 %v820
  %856 = vmatprep.subr.mxu0 0.0
  %857 = vmatpush1.msra.mxu0 %v821
  %858 = vmatprep.subr.mxu0 0.0
  %859 = vmatpush1.msra.mxu0 %v822
  %860 = vmatprep.subr.mxu0 0.0
  %861 = vmatpush1.msra.mxu0 %v823
  %862 = vmatprep.subr.mxu0 0.0
  %863 = vmatpush1.msra.mxu0 %v824
  %864 = vmatprep.subr.mxu0 0.0
  %865 = vmatpush1.msra.mxu0 0.0
  %866 = vmatprep.subr.mxu0 0.0
  %867 = vmatpush1.msra.mxu0 0.0
  %868 = vmatprep.subr.mxu0 0.0
  %869 = vmatpush1.msra.mxu0 0.0
  %870 = vmatprep.subr.mxu0 0.0
  %871 = vmatpush1.msra.mxu0 0.0
  %872 = vmatprep.subr.mxu0 0.0
  %873 = vmatpush1.msra.mxu0 0.0
  %874 = vmatprep.subr.mxu0 0.0
  %875 = vmatpush1.msra.mxu0 0.0
  %876 = vmatprep.subr.mxu0 0.0
  %877 = vmatpush1.msra.mxu0 0.0
  %878 = vmatprep.subr.mxu0 0.0
  %879 = vmatpush1.msra.mxu0 0.0
  %880 = vmatprep.subr.mxu0 0.0
  %881 = vmatpush1.msra.mxu0 0.0
  %882 = vmatprep.subr.mxu0 0.0
  %883 = vmatpush1.msra.mxu0 0.0
  %884 = vmatprep.subr.mxu0 0.0
  %885 = vmatpush1.msra.mxu0 0.0
  %886 = vmatprep.subr.mxu0 0.0
  %887 = vmatpush1.msra.mxu0 0.0
  %888 = vmatprep.subr.mxu0 0.0
  %889 = vmatpush1.msra.mxu0 0.0
  %890 = vmatprep.subr.mxu0 0.0
  %891 = vmatpush1.msra.mxu0 0.0
  %892 = vmatprep.subr.mxu0 0.0
  %893 = vmatpush1.msra.mxu0 0.0
  %894 = vmatprep.subr.mxu0 0.0
  %895 = vmatpush1.msra.mxu0 0.0
  %896 = vmatprep.mubr.f32.mxu0 0.0
  %897 = vmatmul.mubr.f32.gmra.mrb[0].mxu0 %v801
  %v898 = vpop.f32.mrb[0].mxu0
  %v899 = vadd.f32 %v830, %v898
  %v900 = vpop.f32.mrb[0].mxu0
  %901 = vmatprep.mubr.f32.mxu0 0.0
  %902 = vmatmul.mubr.f32.gmra.mrb[0].mxu0 %v802
  %v903 = vpop.f32.mrb[0].mxu0
  %v904 = vadd.f32 %v830, %v903
  %v905 = vpop.f32.mrb[0].mxu0
  %906 = vmatprep.mubr.f32.mxu0 0.0
  %907 = vmatmul.mubr.f32.gmra.mrb[0].mxu0 %v803
  %v908 = vpop.f32.mrb[0].mxu0
  %v909 = vadd.f32 %v830, %v908
  %v910 = vpop.f32.mrb[0].mxu0
  %911 = vmatprep.mubr.f32.mxu0 0.0
  %912 = vmatmul.mubr.f32.gmra.mrb[0].mxu0 %v804
  %v913 = vpop.f32.mrb[0].mxu0
  %v914 = vadd.f32 %v830, %v913
  %v915 = vpop.f32.mrb[0].mxu0
  %916 = vmatprep.mubr.f32.mxu0 0.0
  %917 = vmatmul.mubr.f32.gmra.mrb[0].mxu0 %v805
  %v918 = vpop.f32.mrb[0].mxu0
  %v919 = vadd.f32 %v830, %v918
  %v920 = vpop.f32.mrb[0].mxu0
  %921 = vmatprep.mubr.f32.mxu0 0.0
  %922 = vmatmul.mubr.f32.gmra.mrb[0].mxu0 %v806
  %v923 = vpop.f32.mrb[0].mxu0
  %v924 = vadd.f32 %v830, %v923
  %v925 = vpop.f32.mrb[0].mxu0
  %926 = vmatprep.mubr.f32.mxu0 0.0
  %927 = vmatmul.mubr.f32.gmra.mrb[0].mxu0 %v807
  %v928 = vpop.f32.mrb[0].mxu0
  %v929 = vadd.f32 %v830, %v928
  %v930 = vpop.f32.mrb[0].mxu0
  %931 = vmatprep.mubr.f32.mxu0 0.0
  %932 = vmatmul.mubr.f32.gmra.mrb[0].mxu0 %v808
  %v933 = vpop.f32.mrb[0].mxu0
  %v934 = vadd.f32 %v830, %v933
  %v935 = vpop.f32.mrb[0].mxu0
  %936 = vdwg.mxu0
  %937 = vst [vmem:[%s7] sm:$0xff] %v899
  %938 = vst [vmem:[%s7 + $0x8] sm:$0xff] %v904
  %939 = vst [vmem:[%s7 + $0x10] sm:$0xff] %v909
  %940 = vst [vmem:[%s7 + $0x18] sm:$0xff] %v914
  %941 = vst [vmem:[%s7 + $0x20] sm:$0xff] %v919
  %942 = vst [vmem:[%s7 + $0x28] sm:$0xff] %v924
  %943 = vst [vmem:[%s7 + $0x30] sm:$0xff] %v929
  %944 = vst [vmem:[%s7 + $0x38] sm:$0xff] %v934
  // Predicated region
  $region30: #{_lambda_.1} parent=0 // pred_check
    _
  $region31: #{_lambda_.1} parent=0 // pred_check_branch
    %946 = sbr.rel (0) target = $region33
  $region32: #{_lambda_.1} parent=0 // pred_region
    _
  $region33: #{_lambda_.1} parent=0 // pred_fallthru
    _
  // Predicated region
  $region34: #{_lambda_.1} parent=0 // pred_check
    _
  $region35: #{_lambda_.1} parent=0 // pred_check_branch
    %948 = sbr.rel (0) target = $region37
  $region36: #{_lambda_.1} parent=0 // pred_region
    _
  $region37: #{_lambda_.1} parent=0 // pred_fallthru
    _
  // Predicated region
  $region38: #{_lambda_.1} parent=0 // pred_check
    _
  $region39: #{_lambda_.1} parent=0 // pred_check_branch
    %950 = sbr.rel (0) target = $region41
  $region40: #{_lambda_.1} parent=0 // pred_region
    _
  $region41: #{_lambda_.1} parent=0 // pred_fallthru
    _
  // Predicated region
  $region42: #{_lambda_.1} parent=0 // pred_check
    _
  $region43: #{_lambda_.1} parent=0 // pred_check_branch
    %952 = sbr.rel (0) target = $region45
  $region44: #{_lambda_.1} parent=0 // pred_region
    _
  $region45: #{_lambda_.1} parent=0 // pred_fallthru
    _

</llo_original>
